<compile_context>
chip_gen: v7x
topology: tpu7x:2x2x1
jax: 0.10.0
libtpu: 0.0.40
codegen_flags: <defaults>
</compile_context>

<pallas_src>
import functools

import jax
import jax.numpy as jnp
from jax.experimental import pallas as pl
from jax.experimental.pallas import tpu as pltpu


def _sdpa_kernel(q_ref, k_ref, v_ref, mask_ref, rel_ref, out_ref, *opt_attn_ref,
                 temperature):
    # q_ref: (1, TH, TQ, Dk), k_ref: (1, TH, Lk, Dk), v_ref: (1, TH, Lk, Dv)
    # mask_ref / rel_ref: (1, TH or 1, TQ, Lk)
    inv_temp = 1.0 / temperature
    q = q_ref[0] * jnp.asarray(inv_temp, dtype=q_ref.dtype)   # (TH, TQ, Dk)
    k = k_ref[0]
    v = v_ref[0]
    mask = mask_ref[0].astype(jnp.float32)                    # (TH|1, TQ, Lk)
    rel = rel_ref[0].astype(jnp.float32)

    # scores = (q / T) @ k^T, dot over the last dims (no k.T / XLU copy),
    # f32 accumulation on the MXU.
    scores = jax.lax.dot_general(
        q, k,
        dimension_numbers=(((2,), (2,)), ((0,), (0,))),
        preferred_element_type=jnp.float32)                   # (TH, TQ, Lk)

    # Numerically-stable softmax over Lk.
    m = jnp.max(scores, axis=-1, keepdims=True)
    e = jnp.exp(scores - m)                                   # EUP
    denom = jnp.sum(e, axis=-1, keepdims=True)
    inv = pl.reciprocal(denom, approx=True)                   # EUP slot
    inv = inv * (2.0 - denom * inv)                           # Newton -> ~f32 exact
    p = e * inv

    # dropout (identity in eval) * (1 - mask) * relation_mat
    attn = p * ((1.0 - mask) * rel)                           # (TH, TQ, Lk), f32

    if opt_attn_ref:
        opt_attn_ref[0][0] = attn.astype(opt_attn_ref[0].dtype)

    # output = attn @ v ; feed the PV matmul operands in v's dtype.
    out = jax.lax.dot_general(
        attn.astype(v.dtype), v,
        dimension_numbers=(((2,), (1,)), ((0,), (0,))),
        preferred_element_type=jnp.float32)                   # (TH, TQ, Dv)
    out_ref[0] = out.astype(out_ref.dtype)


def _pick_tiles(H, Lq, Lk, Dk, Dv, itemsize, budget=32 * 1024 * 1024):
    """Pick (heads-per-step, query-tile) so double-buffered blocks fit VMEM
    (sized conservatively for v7x's 64 MiB physical / 32 MiB default scoped)."""

    def footprint(th, tq):
        per_step = (th * tq * Dk            # q
                    + th * Lk * Dk          # k
                    + th * Lk * Dv          # v
                    + 2 * th * tq * Lk      # mask + rel (upper bound)
                    + th * tq * Lk          # attn out
                    + th * tq * Dv)         # out
        return 2 * per_step * itemsize      # x2 for pipeline double-buffering

    # Query tile: full Lq if it fits, otherwise the largest 128-aligned (or
    # 8-aligned) divisor that fits the budget.
    tq = Lq
    if footprint(1, Lq) > budget:
        for c in (2048, 1024, 512, 256, 128, 64, 32, 16, 8):
            if Lq % c == 0 and c < Lq and footprint(1, c) <= budget:
                tq = c
                break

    # Heads per step: grow while the per-step tile is small (amortizes the
    # per-grid-step overhead and widens lane utilization) and VMEM allows.
    th = 1
    while (th < H and H % (th * 2) == 0
           and footprint(th * 2, tq) <= budget
           and th * tq * Lk < 128 * 1024):
        th *= 2
    return th, tq


def scaled_dot_product_attention(q, k, v, relation_mat, mask, temperature,
                                 return_attn=True):
    B, H, Lq, Dk = q.shape
    Lk = k.shape[2]
    Dv = v.shape[3]

    # Keep the head axis un-broadcast (size 1 or H) so we never materialize
    # the H-fold of mask / relation_mat in HBM.
    def _head_preserving(x):
        Hx = x.shape[1]
        assert Hx in (1, H), f"head dim must be 1 or {H}, got {Hx}"
        return jnp.broadcast_to(x, (B, Hx, Lq, Lk))

    maskb = _head_preserving(mask)
    relb = _head_preserving(relation_mat)

    th, tq = _pick_tiles(H, Lq, Lk, Dk, Dv, jnp.dtype(q.dtype).itemsize)
    grid = (B, H // th, Lq // tq)

    def kv_spec(last):
        # K/V blocks independent of qi -> stay resident across query tiles.
        return pl.BlockSpec((1, th, Lk, last), lambda b, h, qi: (b, h, 0, 0))

    def bcastable_spec(x):
        if x.shape[1] == 1:   # shared across heads: reuse the same block
            return pl.BlockSpec((1, 1, tq, Lk), lambda b, h, qi: (b, 0, qi, 0))
        return pl.BlockSpec((1, th, tq, Lk), lambda b, h, qi: (b, h, qi, 0))

    in_specs = [
        pl.BlockSpec((1, th, tq, Dk), lambda b, h, qi: (b, h, qi, 0)),  # q
        kv_spec(Dk),                                                    # k
        kv_spec(Dv),                                                    # v
        bcastable_spec(maskb),                                          # mask
        bcastable_spec(relb),                                           # rel
    ]

    out_spec = pl.BlockSpec((1, th, tq, Dv), lambda b, h, qi: (b, h, qi, 0))
    attn_spec = pl.BlockSpec((1, th, tq, Lk), lambda b, h, qi: (b, h, qi, 0))

    if return_attn:
        out_shape = (jax.ShapeDtypeStruct((B, H, Lq, Dv), q.dtype),
                     jax.ShapeDtypeStruct((B, H, Lq, Lk), q.dtype))
        out_specs = [out_spec, attn_spec]
    else:
        out_shape = jax.ShapeDtypeStruct((B, H, Lq, Dv), q.dtype)
        out_specs = out_spec

    kernel = functools.partial(_sdpa_kernel, temperature=float(temperature))

    result = pl.pallas_call(
        kernel,
        out_shape=out_shape,
        grid_spec=pltpu.PrefetchScalarGridSpec(
            num_scalar_prefetch=0,
            grid=grid,
            in_specs=in_specs,
            out_specs=out_specs,
        ),
        compiler_params=pltpu.CompilerParams(
            dimension_semantics=("parallel", "parallel", "parallel"),
            vmem_limit_bytes=48 * 1024 * 1024,
        ),
    )(q, k, v, maskb, relb)

    if return_attn:
        out, attn = result
        return out, attn
    return result, None


def _reference(q, k, v, relation_mat, mask, temperature):
    attn = jnp.einsum("bhqd,bhkd->bhqk", q / temperature, k)
    attn = jax.nn.softmax(attn, axis=-1)
    attn = attn * (1.0 - mask) * relation_mat
    out = jnp.einsum("bhqk,bhkd->bhqd", attn, v)
    return out, attn


if __name__ == "__main__":
    B, H, L, D = 2, 4, 8, 32
    temperature = D ** 0.5

    key = jax.random.PRNGKey(0)
    kq, kk, kv, km, kr = jax.random.split(key, 5)

    q = jax.random.normal(kq, (B, H, L, D), dtype=jnp.float32)
    k = jax.random.normal(kk, (B, H, L, D), dtype=jnp.float32)
    v = jax.random.normal(kv, (B, H, L, D), dtype=jnp.float32)
    # Padding-style mask shared across heads (1 = masked out) -> head dim 1,
    # never broadcast in HBM. relation_mat is per-head.
    mask = (jax.random.uniform(km, (B, 1, L, L)) < 0.25).astype(jnp.float32)
    relation_mat = jax.random.uniform(kr, (B, H, L, L), dtype=jnp.float32)

    out, attn = scaled_dot_product_attention(q, k, v, relation_mat, mask,
                                             temperature, return_attn=True)
    out = jax.block_until_ready(out)
    attn = jax.block_until_ready(attn)

    ref_out, ref_attn = _reference(q, k, v, relation_mat, mask, temperature)
    assert jnp.allclose(out, ref_out, atol=1e-4, rtol=1e-4)
    assert jnp.allclose(attn, ref_attn, atol=1e-4, rtol=1e-4)

    # Output-only path (skips the O(L^2) attn store entirely).
    out2, _ = scaled_dot_product_attention(q, k, v, relation_mat, mask,
                                           temperature, return_attn=False)
    out2 = jax.block_until_ready(out2)
    assert jnp.allclose(out2, ref_out, atol=1e-4, rtol=1e-4)

    print("KERNEL_OK")
</pallas_src>

<mosaic_0001>
module attributes {stable_mosaic.version = 11 : i64} {
  func.func @_sdpa_kernel(%arg0: i32, %arg1: i32, %arg2: i32, %arg3: memref<1x4x8x32xf32, #tpu.memory_space<vmem>>, %arg4: memref<1x4x8x32xf32, #tpu.memory_space<vmem>>, %arg5: memref<1x4x8x32xf32, #tpu.memory_space<vmem>>, %arg6: memref<1x1x8x8xf32, #tpu.memory_space<vmem>>, %arg7: memref<1x4x8x8xf32, #tpu.memory_space<vmem>>, %arg8: memref<1x4x8x32xf32, #tpu.memory_space<vmem>>, %arg9: memref<1x4x8x8xf32, #tpu.memory_space<vmem>>) attributes {dimension_semantics = [#tpu.dimension_semantics<parallel>, #tpu.dimension_semantics<parallel>, #tpu.dimension_semantics<parallel>], iteration_bounds = array<i64: 2, 1, 1>, scalar_prefetch = 0 : i64, scratch_operands = 0 : i64, tpu.core_type = #tpu.core_type<tc>, window_params = [{transform_indices = @transform_0, window_bounds = array<i64: 1, 4, 8, 32>}, {transform_indices = @transform_1, window_bounds = array<i64: 1, 4, 8, 32>}, {transform_indices = @transform_2, window_bounds = array<i64: 1, 4, 8, 32>}, {transform_indices = @transform_3, window_bounds = array<i64: 1, 1, 8, 8>}, {transform_indices = @transform_4, window_bounds = array<i64: 1, 4, 8, 8>}, {transform_indices = @transform_5, window_bounds = array<i64: 1, 4, 8, 32>}, {transform_indices = @transform_6, window_bounds = array<i64: 1, 4, 8, 8>}]} {
    %c0 = arith.constant 0 : index
    %c0_0 = arith.constant 0 : index
    %c0_1 = arith.constant 0 : index
    %c0_2 = arith.constant 0 : index
    %0 = vector.load %arg3[%c0, %c0_0, %c0_1, %c0_2] : memref<1x4x8x32xf32, #tpu.memory_space<vmem>>, vector<1x4x8x32xf32>
    %1 = vector.shape_cast %0 : vector<1x4x8x32xf32> to vector<4x8x32xf32>
    %cst = arith.constant 0.176776692 : f32
    %2 = vector.broadcast %cst : f32 to vector<4x8x32xf32>
    %3 = arith.mulf %1, %2 : vector<4x8x32xf32>
    %c0_3 = arith.constant 0 : index
    %c0_4 = arith.constant 0 : index
    %c0_5 = arith.constant 0 : index
    %c0_6 = arith.constant 0 : index
    %4 = vector.load %arg4[%c0_3, %c0_4, %c0_5, %c0_6] : memref<1x4x8x32xf32, #tpu.memory_space<vmem>>, vector<1x4x8x32xf32>
    %5 = vector.shape_cast %4 : vector<1x4x8x32xf32> to vector<4x8x32xf32>
    %c0_7 = arith.constant 0 : index
    %c0_8 = arith.constant 0 : index
    %c0_9 = arith.constant 0 : index
    %c0_10 = arith.constant 0 : index
    %6 = vector.load %arg5[%c0_7, %c0_8, %c0_9, %c0_10] : memref<1x4x8x32xf32, #tpu.memory_space<vmem>>, vector<1x4x8x32xf32>
    %7 = vector.shape_cast %6 : vector<1x4x8x32xf32> to vector<4x8x32xf32>
    %c0_11 = arith.constant 0 : index
    %c0_12 = arith.constant 0 : index
    %c0_13 = arith.constant 0 : index
    %c0_14 = arith.constant 0 : index
    %8 = vector.load %arg6[%c0_11, %c0_12, %c0_13, %c0_14] : memref<1x1x8x8xf32, #tpu.memory_space<vmem>>, vector<1x1x8x8xf32>
    %9 = vector.shape_cast %8 : vector<1x1x8x8xf32> to vector<1x8x8xf32>
    %c0_15 = arith.constant 0 : index
    %c0_16 = arith.constant 0 : index
    %c0_17 = arith.constant 0 : index
    %c0_18 = arith.constant 0 : index
    %10 = vector.load %arg7[%c0_15, %c0_16, %c0_17, %c0_18] : memref<1x4x8x8xf32, #tpu.memory_space<vmem>>, vector<1x4x8x8xf32>
    %11 = vector.shape_cast %10 : vector<1x4x8x8xf32> to vector<4x8x8xf32>
    %cst_19 = arith.constant dense<0.000000e+00> : vector<4x8x8xf32>
    %12 = tpu.matmul %3, %5, %cst_19 {dimension_numbers = #tpu.dot_dimension_numbers<[2], [2], [1], [1], [0, 0, 0, 1, 1, 1], [0], [0]>} : vector<4x8x32xf32>, vector<4x8x32xf32>, vector<4x8x8xf32> -> vector<4x8x8xf32>
    %cst_20 = arith.constant dense<0xFF800000> : vector<4x8xf32>
    %13 = vector.multi_reduction <maximumf>, %12, %cst_20 [2] : vector<4x8x8xf32> to vector<4x8xf32>
    %14 = vector.shape_cast %13 : vector<4x8xf32> to vector<4x8x1xf32>
    %15 = vector.broadcast %14 : vector<4x8x1xf32> to vector<4x8x8xf32>
    %16 = arith.subf %12, %15 : vector<4x8x8xf32>
    %17 = math.exp %16 : vector<4x8x8xf32>
    %cst_21 = arith.constant dense<0.000000e+00> : vector<4x8xf32>
    %18 = vector.multi_reduction <add>, %17, %cst_21 [2] : vector<4x8x8xf32> to vector<4x8xf32>
    %19 = vector.shape_cast %18 : vector<4x8xf32> to vector<4x8x1xf32>
    %20 = tpu.reciprocal %19 {approx = true} : vector<4x8x1xf32> -> vector<4x8x1xf32>
    %21 = arith.mulf %19, %20 : vector<4x8x1xf32>
    %cst_22 = arith.constant 2.000000e+00 : f32
    %22 = vector.broadcast %cst_22 : f32 to vector<4x8x1xf32>
    %23 = arith.subf %22, %21 : vector<4x8x1xf32>
    %24 = arith.mulf %20, %23 : vector<4x8x1xf32>
    %25 = vector.broadcast %24 : vector<4x8x1xf32> to vector<4x8x8xf32>
    %26 = arith.mulf %17, %25 : vector<4x8x8xf32>
    %cst_23 = arith.constant 1.000000e+00 : f32
    %27 = vector.broadcast %cst_23 : f32 to vector<1x8x8xf32>
    %28 = arith.subf %27, %9 : vector<1x8x8xf32>
    %29 = vector.broadcast %28 : vector<1x8x8xf32> to vector<4x8x8xf32>
    %30 = arith.mulf %29, %11 : vector<4x8x8xf32>
    %31 = arith.mulf %26, %30 : vector<4x8x8xf32>
    %c0_24 = arith.constant 0 : index
    %c0_25 = arith.constant 0 : index
    %c0_26 = arith.constant 0 : index
    %c0_27 = arith.constant 0 : index
    %32 = vector.load %arg9[%c0_24, %c0_25, %c0_26, %c0_27] : memref<1x4x8x8xf32, #tpu.memory_space<vmem>>, vector<1x4x8x8xf32>
    %33 = vector.shape_cast %32 : vector<1x4x8x8xf32> to vector<4x8x8xf32>
    %34 = vector.shape_cast %31 : vector<4x8x8xf32> to vector<1x4x8x8xf32>
    tpu.vector_store %arg9[%c0_24, %c0_25, %c0_26, %c0_27], %34 {strides = array<i32>} : memref<1x4x8x8xf32, #tpu.memory_space<vmem>>, vector<1x4x8x8xf32>,
    %cst_28 = arith.constant dense<0.000000e+00> : vector<4x8x32xf32>
    %35 = tpu.matmul %31, %7, %cst_28 {dimension_numbers = #tpu.dot_dimension_numbers<[2], [1], [1], [2], [0, 0, 0, 1, 1, 2], [0], [0]>} : vector<4x8x8xf32>, vector<4x8x32xf32>, vector<4x8x32xf32> -> vector<4x8x32xf32>
    %c0_29 = arith.constant 0 : index
    %c0_30 = arith.constant 0 : index
    %c0_31 = arith.constant 0 : index
    %c0_32 = arith.constant 0 : index
    %36 = vector.load %arg8[%c0_29, %c0_30, %c0_31, %c0_32] : memref<1x4x8x32xf32, #tpu.memory_space<vmem>>, vector<1x4x8x32xf32>
    %37 = vector.shape_cast %36 : vector<1x4x8x32xf32> to vector<4x8x32xf32>
    %38 = vector.shape_cast %35 : vector<4x8x32xf32> to vector<1x4x8x32xf32>
    tpu.vector_store %arg8[%c0_29, %c0_30, %c0_31, %c0_32], %38 {strides = array<i32>} : memref<1x4x8x32xf32, #tpu.memory_space<vmem>>, vector<1x4x8x32xf32>,
    return
  }
  func.func @transform_0(%arg0: i32, %arg1: i32, %arg2: i32) -> (i32, i32, i32, i32) {
    %c0_i32 = arith.constant 0 : i32
    %c0_i32_0 = arith.constant 0 : i32
    return %arg0, %arg1, %arg2, %c0_i32 : i32, i32, i32, i32
  }
  func.func @transform_1(%arg0: i32, %arg1: i32, %arg2: i32) -> (i32, i32, i32, i32) {
    %c0_i32 = arith.constant 0 : i32
    %c0_i32_0 = arith.constant 0 : i32
    %c0_i32_1 = arith.constant 0 : i32
    return %arg0, %arg1, %c0_i32, %c0_i32_0 : i32, i32, i32, i32
  }
  func.func @transform_2(%arg0: i32, %arg1: i32, %arg2: i32) -> (i32, i32, i32, i32) {
    %c0_i32 = arith.constant 0 : i32
    %c0_i32_0 = arith.constant 0 : i32
    %c0_i32_1 = arith.constant 0 : i32
    return %arg0, %arg1, %c0_i32, %c0_i32_0 : i32, i32, i32, i32
  }
  func.func @transform_3(%arg0: i32, %arg1: i32, %arg2: i32) -> (i32, i32, i32, i32) {
    %c0_i32 = arith.constant 0 : i32
    %c0_i32_0 = arith.constant 0 : i32
    %c0_i32_1 = arith.constant 0 : i32
    return %arg0, %c0_i32, %arg2, %c0_i32_0 : i32, i32, i32, i32
  }
  func.func @transform_4(%arg0: i32, %arg1: i32, %arg2: i32) -> (i32, i32, i32, i32) {
    %c0_i32 = arith.constant 0 : i32
    %c0_i32_0 = arith.constant 0 : i32
    return %arg0, %arg1, %arg2, %c0_i32 : i32, i32, i32, i32
  }
  func.func @transform_5(%arg0: i32, %arg1: i32, %arg2: i32) -> (i32, i32, i32, i32) {
    %c0_i32 = arith.constant 0 : i32
    %c0_i32_0 = arith.constant 0 : i32
    return %arg0, %arg1, %arg2, %c0_i32 : i32, i32, i32, i32
  }
  func.func @transform_6(%arg0: i32, %arg1: i32, %arg2: i32) -> (i32, i32, i32, i32) {
    %c0_i32 = arith.constant 0 : i32
    %c0_i32_0 = arith.constant 0 : i32
    return %arg0, %arg1, %arg2, %c0_i32 : i32, i32, i32, i32
  }
}

</mosaic_0001>

<llo_original>
// kernel: tpu_custom_call.1
$region0: #{tpu_custom_call.1}
  #allocation0 [shape = 'u32[]', space=smem, size = 0x4, offset = 0x4, fixed_abs, tag = 'smem constant byte address 0x4 - core index']
  #allocation1 [shape = 'u32[144,128]{1,0:T(1,128)}', space=vmem, size = 0x12000, scoped, tag = 'internal scratch']
  %s0 = inlined_call_operand.hbm [shape: f32[2,4,8,32], index: 0, kind: input, shape index: {}]
  %s1 = inlined_call_operand.hbm [shape: f32[2,4,8,32], index: 1, kind: input, shape index: {}]
  %s2 = inlined_call_operand.hbm [shape: f32[2,4,8,32], index: 2, kind: input, shape index: {}]
  %s3 = inlined_call_operand.hbm [shape: f32[2,1,8,8], index: 3, kind: input, shape index: {}]
  %s4 = inlined_call_operand.hbm [shape: f32[2,4,8,8], index: 4, kind: input, shape index: {}]
  %s5 = inlined_call_operand.hbm [shape: f32[2,4,8,32], index: 5, kind: output, shape index: {0}]
  %s6 = inlined_call_operand.hbm [shape: f32[2,4,8,8], index: 6, kind: output, shape index: {1}]
  %7 = xla_tuple %s5, %s6
  %s8 = sld [smem:[#allocation0]]
  $region81: #{tpu_custom_call.1} parent=0
    _
  %s10 = ssub.s32 1, %s8
  %s11 = scalar_select 0, %s10, %s8
  $region1: #{tpu_custom_call.1} parent=0
    #allocation2 [shape = 'u8[32768]{0}', space=vmem, size = 0x8000, scoped, tag = 'input window, operand 0']
    #allocation3 [shape = 's32[2]{0}', space=sflag, size = 0x8, scoped, tag = 'scoped memory for tpu_custom_call.1']
    #allocation4 [shape = 's32[2]{0}', space=sflag, size = 0x8, scoped, tag = 'scoped memory for tpu_custom_call.1']
    #allocation5 [shape = 'u8[32768]{0}', space=vmem, size = 0x8000, scoped, tag = 'input window, operand 1']
    #allocation6 [shape = 's32[2]{0}', space=sflag, size = 0x8, scoped, tag = 'scoped memory for tpu_custom_call.1']
    #allocation7 [shape = 'u8[32768]{0}', space=vmem, size = 0x8000, scoped, tag = 'input window, operand 2']
    #allocation8 [shape = 'u8[8192]{0}', space=vmem, size = 0x2000, scoped, tag = 'input window, operand 3']
    #allocation9 [shape = 's32[2]{0}', space=sflag, size = 0x8, scoped, tag = 'scoped memory for tpu_custom_call.1']
    #allocation10 [shape = 'u8[32768]{0}', space=vmem, size = 0x8000, scoped, tag = 'input window, operand 4']
    #allocation11 [shape = 'u8[32768]{0}', space=vmem, size = 0x8000, scoped, tag = 'output window, operand 0']
    #allocation12 [shape = 'u8[32768]{0}', space=vmem, size = 0x8000, scoped, tag = 'output window, operand 1']
    #allocation13 [shape = 's32[2]{0}', space=sflag, size = 0x8, scoped, tag = 'scoped memory for tpu_custom_call.1']
    %12 = vsyncpa [#allocation3], 0
    %s13 = scalar_lea.sflag [#allocation3], 1
    %14 = vsyncpa %s13, 0
    %15 = vsyncpa [#allocation6], 0
    %s16 = scalar_lea.sflag [#allocation6], 1
    %17 = vsyncpa %s16, 0
    %18 = vsyncpa [#allocation9], 0
    %s19 = scalar_lea.sflag [#allocation9], 1
    %20 = vsyncpa %s19, 0
    %21 = vsyncpa [#allocation4], 0
    %s22 = scalar_lea.sflag [#allocation4], 1
    %23 = vsyncpa %s22, 0
    %24 = vsyncpa [#allocation13], 0
    %s25 = scalar_lea.sflag [#allocation13], 1
    %26 = vsyncpa %s25, 0
    loop: start=0, step=1, limit=4
    $region2: #{tpu_custom_call.1} parent=1 // loop_pre_header
      _
    $region3: #{tpu_custom_call.1} parent=1 // loop_header
      %s28 = sphi 0, %s32
      %p29 = scmp.ge.s32.totalorder %s28, 4
      %s35 = sphi 0, %s54
      %s36 = sphi 0, %s50
      %s37 = sphi 0, %s46
      %s38 = sphi 0, %s35
      %s39 = sphi 0, %s36
      %s40 = sphi 0, %s37
      %s41 = sphi 0, %s38
      %s42 = sphi 0, %s39
      %s43 = sphi 0, %s40
      %s61 = sphi 0, %s63
      %s64 = sphi 0, %s61
      %s65 = sphi 0, %s64
      %s81 = sphi 0, %s65
      %s89 = sphi 0, %s91
      %s92 = sphi 0, %s89
      %s93 = sphi 0, %s92
      %s109 = sphi 0, %s93
      %s117 = sphi 0, %s119
      %s120 = sphi 0, %s117
      %s121 = sphi 0, %s120
      %s137 = sphi 0, %s121
      %s145 = sphi 0, %s147
      %s148 = sphi 0, %s145
      %s149 = sphi 0, %s148
      %s165 = sphi 0, %s149
      %s175 = sphi 0, %s177
      %s178 = sphi 0, %s175
      %s179 = sphi 0, %s178
      %s195 = sphi 0, %s179
      %s205 = sphi 0, %s207
      %s208 = sphi 0, %s205
      %s209 = sphi 0, %s208
      %s225 = sphi 0, %s209
      %s235 = sphi 0, %s237
      %s238 = sphi 0, %s235
      %s239 = sphi 0, %s238
      %s255 = sphi 0, %s239
    $region4: #{tpu_custom_call.1} parent=1 // loop_header_branch
      %31 = sbr.rel (%p29) target = $region8
    $region5: #{tpu_custom_call.1} parent=1 // loop_body
      %s33 = ssub.s32 %s28, 1
      %s34 = ssub.s32 %s28, 2
      %s44 = sadd.s32 1, %s37
      %p45 = scmp.ge.s32.totalorder %s44, 1
      %s46 = scalar_select %p45, 0, %s44
      %s47 = sadd.s32 1, %s36
      %s48 = scalar_select %p45, %s47, %s36
      %p49 = scmp.ge.s32.totalorder %s48, 1
      %s50 = scalar_select %p49, 0, %s48
      %s51 = sadd.s32 1, %s35
      %s52 = scalar_select %p49, %s51, %s35
      %p53 = scmp.ge.s32.totalorder %s52, 2
      %s54 = scalar_select %p53, 0, %s52
      %s55 = ssub.s32 %s35, %s54
      %s56 = ssub.s32 %s36, %s50
      %s57 = sor.u32 %s55, %s56
      %s58 = ssub.s32 %s37, %s46
      %s59 = sor.u32 %s57, %s58
      %p60 = scmp.eq.s32.totalorder %s59, 0
      %s62 = sadd.s32 %s61, 1
      %s63 = scalar_select %p60, %s61, %s62
      %p66 = pneg %p60
      %p67 = scmp.eq.s32.totalorder %s28, 1
      %p68 = por %p66, %p67
      %p69 = scmp.ne.s32.totalorder %s61, %s64
      %p70 = scmp.eq.s32.totalorder %s28, 0
      %p71 = por %p69, %p70
      %p72 = scmp.ne.s32.totalorder %s61, %s64
      %p73 = scmp.eq.s32.totalorder %s33, 1
      %p74 = por %p72, %p73
      %p75 = scmp.ne.s32.totalorder %s64, %s65
      %p76 = scmp.eq.s32.totalorder %s33, 0
      %p77 = por %p75, %p76
      %p78 = scmp.ne.s32.totalorder %s64, %s65
      %p79 = scmp.eq.s32.totalorder %s34, 1
      %p80 = por %p78, %p79
      %p82 = scmp.ne.s32.totalorder %s65, %s81
      %p83 = scmp.eq.s32.totalorder %s34, 0
      %p84 = por %p82, %p83
      %s85 = ssub.s32 %s35, %s54
      %s86 = ssub.s32 %s36, %s50
      %s87 = sor.u32 %s85, %s86
      %p88 = scmp.eq.s32.totalorder %s87, 0
      %s90 = sadd.s32 %s89, 1
      %s91 = scalar_select %p88, %s89, %s90
      %p94 = pneg %p88
      %p95 = scmp.eq.s32.totalorder %s28, 1
      %p96 = por %p94, %p95
      %p97 = scmp.ne.s32.totalorder %s89, %s92
      %p98 = scmp.eq.s32.totalorder %s28, 0
      %p99 = por %p97, %p98
      %p100 = scmp.ne.s32.totalorder %s89, %s92
      %p101 = scmp.eq.s32.totalorder %s33, 1
      %p102 = por %p100, %p101
      %p103 = scmp.ne.s32.totalorder %s92, %s93
      %p104 = scmp.eq.s32.totalorder %s33, 0
      %p105 = por %p103, %p104
      %p106 = scmp.ne.s32.totalorder %s92, %s93
      %p107 = scmp.eq.s32.totalorder %s34, 1
      %p108 = por %p106, %p107
      %p110 = scmp.ne.s32.totalorder %s93, %s109
      %p111 = scmp.eq.s32.totalorder %s34, 0
      %p112 = por %p110, %p111
      %s113 = ssub.s32 %s35, %s54
      %s114 = ssub.s32 %s36, %s50
      %s115 = sor.u32 %s113, %s114
      %p116 = scmp.eq.s32.totalorder %s115, 0
      %s118 = sadd.s32 %s117, 1
      %s119 = scalar_select %p116, %s117, %s118
      %p122 = pneg %p116
      %p123 = scmp.eq.s32.totalorder %s28, 1
      %p124 = por %p122, %p123
      %p125 = scmp.ne.s32.totalorder %s117, %s120
      %p126 = scmp.eq.s32.totalorder %s28, 0
      %p127 = por %p125, %p126
      %p128 = scmp.ne.s32.totalorder %s117, %s120
      %p129 = scmp.eq.s32.totalorder %s33, 1
      %p130 = por %p128, %p129
      %p131 = scmp.ne.s32.totalorder %s120, %s121
      %p132 = scmp.eq.s32.totalorder %s33, 0
      %p133 = por %p131, %p132
      %p134 = scmp.ne.s32.totalorder %s120, %s121
      %p135 = scmp.eq.s32.totalorder %s34, 1
      %p136 = por %p134, %p135
      %p138 = scmp.ne.s32.totalorder %s121, %s137
      %p139 = scmp.eq.s32.totalorder %s34, 0
      %p140 = por %p138, %p139
      %s141 = ssub.s32 %s35, %s54
      %s142 = ssub.s32 %s37, %s46
      %s143 = sor.u32 %s141, %s142
      %p144 = scmp.eq.s32.totalorder %s143, 0
      %s146 = sadd.s32 %s145, 1
      %s147 = scalar_select %p144, %s145, %s146
      %p150 = pneg %p144
      %p151 = scmp.eq.s32.totalorder %s28, 1
      %p152 = por %p150, %p151
      %p153 = scmp.ne.s32.totalorder %s145, %s148
      %p154 = scmp.eq.s32.totalorder %s28, 0
      %p155 = por %p153, %p154
      %p156 = scmp.ne.s32.totalorder %s145, %s148
      %p157 = scmp.eq.s32.totalorder %s33, 1
      %p158 = por %p156, %p157
      %p159 = scmp.ne.s32.totalorder %s148, %s149
      %p160 = scmp.eq.s32.totalorder %s33, 0
      %p161 = por %p159, %p160
      %p162 = scmp.ne.s32.totalorder %s148, %s149
      %p163 = scmp.eq.s32.totalorder %s34, 1
      %p164 = por %p162, %p163
      %p166 = scmp.ne.s32.totalorder %s149, %s165
      %p167 = scmp.eq.s32.totalorder %s34, 0
      %p168 = por %p166, %p167
      %s169 = ssub.s32 %s35, %s54
      %s170 = ssub.s32 %s36, %s50
      %s171 = sor.u32 %s169, %s170
      %s172 = ssub.s32 %s37, %s46
      %s173 = sor.u32 %s171, %s172
      %p174 = scmp.eq.s32.totalorder %s173, 0
      %s176 = sadd.s32 %s175, 1
      %s177 = scalar_select %p174, %s175, %s176
      %p180 = pneg %p174
      %p181 = scmp.eq.s32.totalorder %s28, 1
      %p182 = por %p180, %p181
      %p183 = scmp.ne.s32.totalorder %s175, %s178
      %p184 = scmp.eq.s32.totalorder %s28, 0
      %p185 = por %p183, %p184
      %p186 = scmp.ne.s32.totalorder %s175, %s178
      %p187 = scmp.eq.s32.totalorder %s33, 1
      %p188 = por %p186, %p187
      %p189 = scmp.ne.s32.totalorder %s178, %s179
      %p190 = scmp.eq.s32.totalorder %s33, 0
      %p191 = por %p189, %p190
      %p192 = scmp.ne.s32.totalorder %s178, %s179
      %p193 = scmp.eq.s32.totalorder %s34, 1
      %p194 = por %p192, %p193
      %p196 = scmp.ne.s32.totalorder %s179, %s195
      %p197 = scmp.eq.s32.totalorder %s34, 0
      %p198 = por %p196, %p197
      %s199 = ssub.s32 %s35, %s54
      %s200 = ssub.s32 %s36, %s50
      %s201 = sor.u32 %s199, %s200
      %s202 = ssub.s32 %s37, %s46
      %s203 = sor.u32 %s201, %s202
      %p204 = scmp.eq.s32.totalorder %s203, 0
      %s206 = sadd.s32 %s205, 1
      %s207 = scalar_select %p204, %s205, %s206
      %p210 = pneg %p204
      %p211 = scmp.eq.s32.totalorder %s28, 1
      %p212 = por %p210, %p211
      %p213 = scmp.ne.s32.totalorder %s205, %s208
      %p214 = scmp.eq.s32.totalorder %s28, 0
      %p215 = por %p213, %p214
      %p216 = scmp.ne.s32.totalorder %s205, %s208
      %p217 = scmp.eq.s32.totalorder %s33, 1
      %p218 = por %p216, %p217
      %p219 = scmp.ne.s32.totalorder %s208, %s209
      %p220 = scmp.eq.s32.totalorder %s33, 0
      %p221 = por %p219, %p220
      %p222 = scmp.ne.s32.totalorder %s208, %s209
      %p223 = scmp.eq.s32.totalorder %s34, 1
      %p224 = por %p222, %p223
      %p226 = scmp.ne.s32.totalorder %s209, %s225
      %p227 = scmp.eq.s32.totalorder %s34, 0
      %p228 = por %p226, %p227
      %s229 = ssub.s32 %s35, %s54
      %s230 = ssub.s32 %s36, %s50
      %s231 = sor.u32 %s229, %s230
      %s232 = ssub.s32 %s37, %s46
      %s233 = sor.u32 %s231, %s232
      %p234 = scmp.eq.s32.totalorder %s233, 0
      %s236 = sadd.s32 %s235, 1
      %s237 = scalar_select %p234, %s235, %s236
      %p240 = pneg %p234
      %p241 = scmp.eq.s32.totalorder %s28, 1
      %p242 = por %p240, %p241
      %p243 = scmp.ne.s32.totalorder %s235, %s238
      %p244 = scmp.eq.s32.totalorder %s28, 0
      %p245 = por %p243, %p244
      %p246 = scmp.ne.s32.totalorder %s235, %s238
      %p247 = scmp.eq.s32.totalorder %s33, 1
      %p248 = por %p246, %p247
      %p249 = scmp.ne.s32.totalorder %s238, %s239
      %p250 = scmp.eq.s32.totalorder %s33, 0
      %p251 = por %p249, %p250
      %p252 = scmp.ne.s32.totalorder %s238, %s239
      %p253 = scmp.eq.s32.totalorder %s34, 1
      %p254 = por %p252, %p253
      %p256 = scmp.ne.s32.totalorder %s239, %s255
      %p257 = scmp.eq.s32.totalorder %s34, 0
      %p258 = por %p256, %p257
      %p259 = scmp.le.s32.totalorder 1, %s28
      %p260 = scmp.lt.s32.totalorder %s28, 3
      %p261 = pnand %p259, %p260
      %p262 = pneg %p261
      // Predicated region
      $region9: #{tpu_custom_call.1} parent=5 // pred_check
        _
      $region10: #{tpu_custom_call.1} parent=5 // pred_check_branch
        %264 = sbr.rel (%p261) target = $region12
      $region11: #{tpu_custom_call.1} parent=5 // pred_region
        %s265 = ssub.s32 %s28, 1
      $region12: #{tpu_custom_call.1} parent=5 // pred_fallthru
        _
      %p266 = scmp.lt.s32.totalorder %s28, 2
      // Predicated region
      $region13: #{tpu_custom_call.1} parent=5 // pred_check
        %p267 = pneg %p266
      $region14: #{tpu_custom_call.1} parent=5 // pred_check_branch
        %269 = sbr.rel (%p267) target = $region16
      $region15: #{tpu_custom_call.1} parent=5 // pred_region
        // Predicated region
        $region17: #{tpu_custom_call.1} parent=15 // pred_check
          %p270 = pneg %p71
        $region18: #{tpu_custom_call.1} parent=15 // pred_check_branch
          %272 = sbr.rel (%p270) target = $region20
        $region19: #{tpu_custom_call.1} parent=15 // pred_region
          %s273 = sand.u32 %s61, 1
          %s274 = scalar_lea.sflag [#allocation3], %s273
          %s275 = sand.u32 %s61, 1
          %s276 = smul.addr %s275, 32
          %s277 = scalar_lea.vmem [#allocation2], %s276
          %s278 = smul.u32 4, %s36
          %s280 = ssub.s32 512, 512
          %281 = vsyncadd %s274, %s280
          %s282 = sadd.s32 %s37, %s278
          %s283 = smul.addr %s35, 4
          %s284 = sadd.s32 %s282, %s283
          %s285 = smul.addr %s284, 128
          %s286 = scalar_lea.hbm %s0, %s285
          %s287 = sshll.u32 %s277, 4
          %s288 = int_to_ptr.vmem [resolvable:$true] %s287
          %293 = dma.hbm_to_vmem [thread:$0]  %s286, 512, %s288, %s274, 128, 128, 8
        $region20: #{tpu_custom_call.1} parent=15 // pred_fallthru
          _
        // Predicated region
        $region21: #{tpu_custom_call.1} parent=15 // pred_check
          %p294 = pneg %p99
        $region22: #{tpu_custom_call.1} parent=15 // pred_check_branch
          %296 = sbr.rel (%p294) target = $region24
        $region23: #{tpu_custom_call.1} parent=15 // pred_region
          %s297 = sand.u32 %s28, 1
          %s298 = scalar_lea.sflag [#allocation6], %s297
          %s299 = sand.u32 %s89, 1
          %s300 = smul.addr %s299, 32
          %s301 = scalar_lea.vmem [#allocation5], %s300
          %s302 = smul.u32 4, %s36
          %s304 = ssub.s32 512, 512
          %305 = vsyncadd %s298, %s304
          %s306 = smul.addr %s35, 4
          %s307 = sadd.s32 %s302, %s306
          %s308 = smul.addr %s307, 128
          %s309 = scalar_lea.hbm %s1, %s308
          %s310 = sshll.u32 %s301, 4
          %s311 = int_to_ptr.vmem [resolvable:$true] %s310
          %316 = dma.hbm_to_vmem [thread:$0]  %s309, 512, %s311, %s298, 128, 128, 8
        $region24: #{tpu_custom_call.1} parent=15 // pred_fallthru
          _
        // Predicated region
        $region25: #{tpu_custom_call.1} parent=15 // pred_check
          %p317 = pneg %p127
        $region26: #{tpu_custom_call.1} parent=15 // pred_check_branch
          %319 = sbr.rel (%p317) target = $region28
        $region27: #{tpu_custom_call.1} parent=15 // pred_region
          %s320 = sand.u32 %s28, 1
          %s321 = scalar_lea.sflag [#allocation6], %s320
          %s322 = sand.u32 %s117, 1
          %s323 = smul.addr %s322, 32
          %s324 = scalar_lea.vmem [#allocation7], %s323
          %s325 = smul.u32 4, %s36
          %s327 = ssub.s32 512, 512
          %328 = vsyncadd %s321, %s327
          %s329 = smul.addr %s35, 4
          %s330 = sadd.s32 %s325, %s329
          %s331 = smul.addr %s330, 128
          %s332 = scalar_lea.hbm %s2, %s331
          %s333 = sshll.u32 %s324, 4
          %s334 = int_to_ptr.vmem [resolvable:$true] %s333
          %339 = dma.hbm_to_vmem [thread:$0]  %s332, 512, %s334, %s321, 128, 128, 8
        $region28: #{tpu_custom_call.1} parent=15 // pred_fallthru
          _
        // Predicated region
        $region29: #{tpu_custom_call.1} parent=15 // pred_check
          %p340 = pneg %p155
        $region30: #{tpu_custom_call.1} parent=15 // pred_check_branch
          %342 = sbr.rel (%p340) target = $region32
        $region31: #{tpu_custom_call.1} parent=15 // pred_region
          %s343 = sand.u32 %s28, 1
          %s344 = scalar_lea.sflag [#allocation9], %s343
          %s345 = sand.u32 %s145, 1
          %s346 = smul.addr %s345, 8
          %s347 = scalar_lea.vmem [#allocation8], %s346
          %s349 = ssub.s32 128, 128
          %350 = vsyncadd %s344, %s349
          %s351 = sadd.s32 %s37, %s35
          %s352 = smul.addr %s351, 128
          %s353 = scalar_lea.hbm %s3, %s352
          %s355 = sshll.u32 %s347, 4
          %s356 = int_to_ptr.vmem [resolvable:$true] %s355
          %358 = dma.hbm_to_vmem [thread:$0]  %s353, 128, %s356, %s344
        $region32: #{tpu_custom_call.1} parent=15 // pred_fallthru
          _
        // Predicated region
        $region33: #{tpu_custom_call.1} parent=15 // pred_check
          %p359 = pneg %p185
        $region34: #{tpu_custom_call.1} parent=15 // pred_check_branch
          %361 = sbr.rel (%p359) target = $region36
        $region35: #{tpu_custom_call.1} parent=15 // pred_region
          %s362 = sand.u32 %s28, 1
          %s363 = scalar_lea.sflag [#allocation9], %s362
          %s364 = sand.u32 %s175, 1
          %s365 = smul.addr %s364, 32
          %s366 = scalar_lea.vmem [#allocation10], %s365
          %s367 = smul.u32 4, %s36
          %s369 = ssub.s32 512, 512
          %370 = vsyncadd %s363, %s369
          %s371 = sadd.s32 %s37, %s367
          %s372 = smul.addr %s35, 4
          %s373 = sadd.s32 %s371, %s372
          %s374 = smul.addr %s373, 128
          %s375 = scalar_lea.hbm %s4, %s374
          %s376 = sshll.u32 %s366, 4
          %s377 = int_to_ptr.vmem [resolvable:$true] %s376
          %382 = dma.hbm_to_vmem [thread:$0]  %s375, 512, %s377, %s363, 128, 128, 8
        $region36: #{tpu_custom_call.1} parent=15 // pred_fallthru
          _
      $region16: #{tpu_custom_call.1} parent=5 // pred_fallthru
        _
      %p383 = scmp.le.s32.totalorder 1, %s28
      %p384 = scmp.lt.s32.totalorder %s28, 3
      %p385 = pnand %p383, %p384
      %p386 = pneg %p385
      // Predicated region
      $region37: #{tpu_custom_call.1} parent=5 // pred_check
        _
      $region38: #{tpu_custom_call.1} parent=5 // pred_check_branch
        %388 = sbr.rel (%p385) target = $region40
      $region39: #{tpu_custom_call.1} parent=5 // pred_region
        %s389 = ssub.s32 %s28, 1
        %s390 = sand.u32 %s64, 1
        %s391 = scalar_lea.sflag [#allocation3], %s390
        %s392 = sand.u32 %s64, 1
        %s393 = smul.addr %s392, 32
        %s394 = scalar_lea.vmem [#allocation2], %s393
        // Predicated region
        $region41: #{tpu_custom_call.1} parent=39 // pred_check
          %p395 = pneg %p77
        $region42: #{tpu_custom_call.1} parent=39 // pred_check_branch
          %397 = sbr.rel (%p395) target = $region44
        $region43: #{tpu_custom_call.1} parent=39 // pred_region
          %398 = dma.done %s391, 512
        $region44: #{tpu_custom_call.1} parent=39 // pred_fallthru
          _
        %s399 = sand.u32 %s33, 1
        %s400 = scalar_lea.sflag [#allocation6], %s399
        %s401 = sand.u32 %s92, 1
        %s402 = smul.addr %s401, 32
        %s403 = scalar_lea.vmem [#allocation5], %s402
        // Predicated region
        $region45: #{tpu_custom_call.1} parent=39 // pred_check
          %p404 = pneg %p105
        $region46: #{tpu_custom_call.1} parent=39 // pred_check_branch
          %406 = sbr.rel (%p404) target = $region48
        $region47: #{tpu_custom_call.1} parent=39 // pred_region
          %407 = dma.done %s400, 512
        $region48: #{tpu_custom_call.1} parent=39 // pred_fallthru
          _
        %s408 = sand.u32 %s33, 1
        %s409 = scalar_lea.sflag [#allocation6], %s408
        %s410 = sand.u32 %s120, 1
        %s411 = smul.addr %s410, 32
        %s412 = scalar_lea.vmem [#allocation7], %s411
        // Predicated region
        $region49: #{tpu_custom_call.1} parent=39 // pred_check
          %p413 = pneg %p133
        $region50: #{tpu_custom_call.1} parent=39 // pred_check_branch
          %415 = sbr.rel (%p413) target = $region52
        $region51: #{tpu_custom_call.1} parent=39 // pred_region
          %416 = dma.done %s409, 512
        $region52: #{tpu_custom_call.1} parent=39 // pred_fallthru
          _
        %s417 = sand.u32 %s33, 1
        %s418 = scalar_lea.sflag [#allocation9], %s417
        %s419 = sand.u32 %s148, 1
        %s420 = smul.addr %s419, 8
        %s421 = scalar_lea.vmem [#allocation8], %s420
        // Predicated region
        $region53: #{tpu_custom_call.1} parent=39 // pred_check
          %p422 = pneg %p161
        $region54: #{tpu_custom_call.1} parent=39 // pred_check_branch
          %424 = sbr.rel (%p422) target = $region56
        $region55: #{tpu_custom_call.1} parent=39 // pred_region
          %425 = dma.done %s418, 128
        $region56: #{tpu_custom_call.1} parent=39 // pred_fallthru
          _
        %s426 = sand.u32 %s33, 1
        %s427 = scalar_lea.sflag [#allocation9], %s426
        %s428 = sand.u32 %s178, 1
        %s429 = smul.addr %s428, 32
        %s430 = scalar_lea.vmem [#allocation10], %s429
        // Predicated region
        $region57: #{tpu_custom_call.1} parent=39 // pred_check
          %p431 = pneg %p191
        $region58: #{tpu_custom_call.1} parent=39 // pred_check_branch
          %433 = sbr.rel (%p431) target = $region60
        $region59: #{tpu_custom_call.1} parent=39 // pred_region
          %434 = dma.done %s427, 512
        $region60: #{tpu_custom_call.1} parent=39 // pred_fallthru
          _
        %s435 = sand.u32 %s64, 1
        %s436 = scalar_lea.sflag [#allocation3], %s435
        %s437 = sand.u32 %s64, 1
        %s438 = smul.addr %s437, 32
        %s439 = scalar_lea.vmem [#allocation2], %s438
        %p440 = pneg %p77
        %p441 = pneg %p74
        %s442 = sand.u32 %s33, 1
        %s443 = scalar_lea.sflag [#allocation6], %s442
        %s444 = sand.u32 %s92, 1
        %s445 = smul.addr %s444, 32
        %s446 = scalar_lea.vmem [#allocation5], %s445
        %p447 = pneg %p105
        %p448 = pneg %p102
        %s449 = sand.u32 %s33, 1
        %s450 = scalar_lea.sflag [#allocation6], %s449
        %s451 = sand.u32 %s120, 1
        %s452 = smul.addr %s451, 32
        %s453 = scalar_lea.vmem [#allocation7], %s452
        %p454 = pneg %p133
        %p455 = pneg %p130
        %s456 = sand.u32 %s33, 1
        %s457 = scalar_lea.sflag [#allocation9], %s456
        %s458 = sand.u32 %s148, 1
        %s459 = smul.addr %s458, 8
        %s460 = scalar_lea.vmem [#allocation8], %s459
        %p461 = pneg %p161
        %p462 = pneg %p158
        %s463 = sand.u32 %s33, 1
        %s464 = scalar_lea.sflag [#allocation9], %s463
        %s465 = sand.u32 %s178, 1
        %s466 = smul.addr %s465, 32
        %s467 = scalar_lea.vmem [#allocation10], %s466
        %p468 = pneg %p191
        %p469 = pneg %p188
        %p470 = pneg %p221
        %p471 = pneg %p218
        %s472 = sand.u32 %s208, 1
        %s473 = scalar_lea.sflag [#allocation4], %s472
        %s474 = sand.u32 %s208, 1
        %s475 = smul.addr %s474, 32
        %s476 = scalar_lea.vmem [#allocation11], %s475
        %p477 = pneg %p251
        %p478 = pneg %p248
        %s479 = sand.u32 %s238, 1
        %s480 = scalar_lea.sflag [#allocation13], %s479
        %s481 = sand.u32 %s238, 1
        %s482 = smul.addr %s481, 32
        %s483 = scalar_lea.vmem [#allocation12], %s482
        %s484 = smul.u32 4, %s39
        %s485 = smul.u32 4, %s39
        %s486 = smul.u32 4, %s39
        %s487 = smul.u32 4, %s39
        %s488 = smul.u32 4, %s39
        %s489 = smul.u32 4, %s39
        %v490 = vld [vmem:[%s394] sm:$0xff]
        %v491 = vld [vmem:[%s394 + $0x8] sm:$0xff]
        %v492 = vld [vmem:[%s394 + $0x10] sm:$0xff]
        %v493 = vld [vmem:[%s394 + $0x18] sm:$0xff]
        %v494 = vmul.f32 %v490, 0.17677669
        %v495 = vmul.f32 %v491, 0.17677669
        %v496 = vmul.f32 %v492, 0.17677669
        %v497 = vmul.f32 %v493, 0.17677669
        %v498 = vld [vmem:[%s403] sm:$0xff]
        %v499 = vld [vmem:[%s403 + $0x8] sm:$0xff]
        %v500 = vld [vmem:[%s403 + $0x10] sm:$0xff]
        %v501 = vld [vmem:[%s403 + $0x18] sm:$0xff]
        %v502 = vld [vmem:[%s412] sm:$0xff]
        %v503 = vld [vmem:[%s412 + $0x8] sm:$0xff]
        %v504 = vld [vmem:[%s412 + $0x10] sm:$0xff]
        %v505 = vld [vmem:[%s412 + $0x18] sm:$0xff]
        %v506 = vld [vmem:[%s421] sm:$0xff]
        %v507 = vld [vmem:[%s430] sm:$0xff]
        %v508 = vld [vmem:[%s430 + $0x8] sm:$0xff]
        %v509 = vld [vmem:[%s430 + $0x10] sm:$0xff]
        %v510 = vld [vmem:[%s430 + $0x18] sm:$0xff]
        %vm511 = vcmask 261120
        %v513 = vsel %vm511, %v494, 0
        %v516 = vsel %vm511, %v498, 0
        %518 = vmatprep.subr.mxu0 0.0
        %519 = vmatpush1.xpose.msra.mxu0 %v516
        %520 = vmatprep.subr.mxu0 0.0
        %521 = vmatpush1.xpose.msra.mxu0 0.0
        %522 = vmatprep.subr.mxu0 0.0
        %523 = vmatpush1.xpose.msra.mxu0 0.0
        %524 = vmatprep.subr.mxu0 0.0
        %525 = vmatpush1.xpose.msra.mxu0 0.0
        %526 = vmatprep.subr.mxu0 0.0
        %527 = vmatpush1.xpose.msra.mxu0 0.0
        %528 = vmatprep.subr.mxu0 0.0
        %529 = vmatpush1.xpose.msra.mxu0 0.0
        %530 = vmatprep.subr.mxu0 0.0
        %531 = vmatpush1.xpose.msra.mxu0 0.0
        %532 = vmatprep.subr.mxu0 0.0
        %533 = vmatpush1.xpose.msra.mxu0 0.0
        %534 = vmatprep.subr.mxu0 0.0
        %535 = vmatpush1.xpose.msra.mxu0 0.0
        %536 = vmatprep.subr.mxu0 0.0
        %537 = vmatpush1.xpose.msra.mxu0 0.0
        %538 = vmatprep.subr.mxu0 0.0
        %539 = vmatpush1.xpose.msra.mxu0 0.0
        %540 = vmatprep.subr.mxu0 0.0
        %541 = vmatpush1.xpose.msra.mxu0 0.0
        %542 = vmatprep.subr.mxu0 0.0
        %543 = vmatpush1.xpose.msra.mxu0 0.0
        %544 = vmatprep.subr.mxu0 0.0
        %545 = vmatpush1.xpose.msra.mxu0 0.0
        %546 = vmatprep.subr.mxu0 0.0
        %547 = vmatpush1.xpose.msra.mxu0 0.0
        %548 = vmatprep.subr.mxu0 0.0
        %549 = vmatpush1.xpose.msra.mxu0 0.0
        %550 = vmatprep.subr.mxu0 0.0
        %551 = vmatpush1.xpose.msra.mxu0 0.0
        %552 = vmatprep.subr.mxu0 0.0
        %553 = vmatpush1.xpose.msra.mxu0 0.0
        %554 = vmatprep.subr.mxu0 0.0
        %555 = vmatpush1.xpose.msra.mxu0 0.0
        %556 = vmatprep.subr.mxu0 0.0
        %557 = vmatpush1.xpose.msra.mxu0 0.0
        %558 = vmatprep.subr.mxu0 0.0
        %559 = vmatpush1.xpose.msra.mxu0 0.0
        %560 = vmatprep.subr.mxu0 0.0
        %561 = vmatpush1.xpose.msra.mxu0 0.0
        %562 = vmatprep.subr.mxu0 0.0
        %563 = vmatpush1.xpose.msra.mxu0 0.0
        %564 = vmatprep.subr.mxu0 0.0
        %565 = vmatpush1.xpose.msra.mxu0 0.0
        %566 = vmatprep.subr.mxu0 0.0
        %567 = vmatpush1.xpose.msra.mxu0 0.0
        %568 = vmatprep.subr.mxu0 0.0
        %569 = vmatpush1.xpose.msra.mxu0 0.0
        %570 = vmatprep.subr.mxu0 0.0
        %571 = vmatpush1.xpose.msra.mxu0 0.0
        %572 = vmatprep.subr.mxu0 0.0
        %573 = vmatpush1.xpose.msra.mxu0 0.0
        %574 = vmatprep.subr.mxu0 0.0
        %575 = vmatpush1.xpose.msra.mxu0 0.0
        %576 = vmatprep.subr.mxu0 0.0
        %577 = vmatpush1.xpose.msra.mxu0 0.0
        %578 = vmatprep.subr.mxu0 0.0
        %579 = vmatpush1.xpose.msra.mxu0 0.0
        %580 = vmatprep.subr.mxu0 0.0
        %581 = vmatpush1.xpose.msra.mxu0 0.0
        %582 = vmatprep.mubr.f32.mxu0 0.0
        %583 = vmatmul.mubr.f32.gmra.mrb[0].mxu0 %v513
        %v584 = vpop.f32.mrb[0].mxu0
        %v585 = vadd.f32 0.0, %v584
        %v586 = vpop.f32.mrb[0].mxu0
        %587 = vdwg.mxu0
        %v589 = vsel %vm511, %v495, 0
        %v592 = vsel %vm511, %v499, 0
        %594 = vmatprep.subr.mxu0 0.0
        %595 = vmatpush1.xpose.msra.mxu0 %v592
        %596 = vmatprep.subr.mxu0 0.0
        %597 = vmatpush1.xpose.msra.mxu0 0.0
        %598 = vmatprep.subr.mxu0 0.0
        %599 = vmatpush1.xpose.msra.mxu0 0.0
        %600 = vmatprep.subr.mxu0 0.0
        %601 = vmatpush1.xpose.msra.mxu0 0.0
        %602 = vmatprep.subr.mxu0 0.0
        %603 = vmatpush1.xpose.msra.mxu0 0.0
        %604 = vmatprep.subr.mxu0 0.0
        %605 = vmatpush1.xpose.msra.mxu0 0.0
        %606 = vmatprep.subr.mxu0 0.0
        %607 = vmatpush1.xpose.msra.mxu0 0.0
        %608 = vmatprep.subr.mxu0 0.0
        %609 = vmatpush1.xpose.msra.mxu0 0.0
        %610 = vmatprep.subr.mxu0 0.0
        %611 = vmatpush1.xpose.msra.mxu0 0.0
        %612 = vmatprep.subr.mxu0 0.0
        %613 = vmatpush1.xpose.msra.mxu0 0.0
        %614 = vmatprep.subr.mxu0 0.0
        %615 = vmatpush1.xpose.msra.mxu0 0.0
        %616 = vmatprep.subr.mxu0 0.0
        %617 = vmatpush1.xpose.msra.mxu0 0.0
        %618 = vmatprep.subr.mxu0 0.0
        %619 = vmatpush1.xpose.msra.mxu0 0.0
        %620 = vmatprep.subr.mxu0 0.0
        %621 = vmatpush1.xpose.msra.mxu0 0.0
        %622 = vmatprep.subr.mxu0 0.0
        %623 = vmatpush1.xpose.msra.mxu0 0.0
        %624 = vmatprep.subr.mxu0 0.0
        %625 = vmatpush1.xpose.msra.mxu0 0.0
        %626 = vmatprep.subr.mxu0 0.0
        %627 = vmatpush1.xpose.msra.mxu0 0.0
        %628 = vmatprep.subr.mxu0 0.0
        %629 = vmatpush1.xpose.msra.mxu0 0.0
        %630 = vmatprep.subr.mxu0 0.0
        %631 = vmatpush1.xpose.msra.mxu0 0.0
        %632 = vmatprep.subr.mxu0 0.0
        %633 = vmatpush1.xpose.msra.mxu0 0.0
        %634 = vmatprep.subr.mxu0 0.0
        %635 = vmatpush1.xpose.msra.mxu0 0.0
        %636 = vmatprep.subr.mxu0 0.0
        %637 = vmatpush1.xpose.msra.mxu0 0.0
        %638 = vmatprep.subr.mxu0 0.0
        %639 = vmatpush1.xpose.msra.mxu0 0.0
        %640 = vmatprep.subr.mxu0 0.0
        %641 = vmatpush1.xpose.msra.mxu0 0.0
        %642 = vmatprep.subr.mxu0 0.0
        %643 = vmatpush1.xpose.msra.mxu0 0.0
        %644 = vmatprep.subr.mxu0 0.0
        %645 = vmatpush1.xpose.msra.mxu0 0.0
        %646 = vmatprep.subr.mxu0 0.0
        %647 = vmatpush1.xpose.msra.mxu0 0.0
        %648 = vmatprep.subr.mxu0 0.0
        %649 = vmatpush1.xpose.msra.mxu0 0.0
        %650 = vmatprep.subr.mxu0 0.0
        %651 = vmatpush1.xpose.msra.mxu0 0.0
        %652 = vmatprep.subr.mxu0 0.0
        %653 = vmatpush1.xpose.msra.mxu0 0.0
        %654 = vmatprep.subr.mxu0 0.0
        %655 = vmatpush1.xpose.msra.mxu0 0.0
        %656 = vmatprep.subr.mxu0 0.0
        %657 = vmatpush1.xpose.msra.mxu0 0.0
        %658 = vmatprep.mubr.f32.mxu0 0.0
        %659 = vmatmul.mubr.f32.gmra.mrb[0].mxu0 %v589
        %v660 = vpop.f32.mrb[0].mxu0
        %v661 = vadd.f32 0.0, %v660
        %v662 = vpop.f32.mrb[0].mxu0
        %663 = vdwg.mxu0
        %v665 = vsel %vm511, %v496, 0
        %v668 = vsel %vm511, %v500, 0
        %670 = vmatprep.subr.mxu0 0.0
        %671 = vmatpush1.xpose.msra.mxu0 %v668
        %672 = vmatprep.subr.mxu0 0.0
        %673 = vmatpush1.xpose.msra.mxu0 0.0
        %674 = vmatprep.subr.mxu0 0.0
        %675 = vmatpush1.xpose.msra.mxu0 0.0
        %676 = vmatprep.subr.mxu0 0.0
        %677 = vmatpush1.xpose.msra.mxu0 0.0
        %678 = vmatprep.subr.mxu0 0.0
        %679 = vmatpush1.xpose.msra.mxu0 0.0
        %680 = vmatprep.subr.mxu0 0.0
        %681 = vmatpush1.xpose.msra.mxu0 0.0
        %682 = vmatprep.subr.mxu0 0.0
        %683 = vmatpush1.xpose.msra.mxu0 0.0
        %684 = vmatprep.subr.mxu0 0.0
        %685 = vmatpush1.xpose.msra.mxu0 0.0
        %686 = vmatprep.subr.mxu0 0.0
        %687 = vmatpush1.xpose.msra.mxu0 0.0
        %688 = vmatprep.subr.mxu0 0.0
        %689 = vmatpush1.xpose.msra.mxu0 0.0
        %690 = vmatprep.subr.mxu0 0.0
        %691 = vmatpush1.xpose.msra.mxu0 0.0
        %692 = vmatprep.subr.mxu0 0.0
        %693 = vmatpush1.xpose.msra.mxu0 0.0
        %694 = vmatprep.subr.mxu0 0.0
        %695 = vmatpush1.xpose.msra.mxu0 0.0
        %696 = vmatprep.subr.mxu0 0.0
        %697 = vmatpush1.xpose.msra.mxu0 0.0
        %698 = vmatprep.subr.mxu0 0.0
        %699 = vmatpush1.xpose.msra.mxu0 0.0
        %700 = vmatprep.subr.mxu0 0.0
        %701 = vmatpush1.xpose.msra.mxu0 0.0
        %702 = vmatprep.subr.mxu0 0.0
        %703 = vmatpush1.xpose.msra.mxu0 0.0
        %704 = vmatprep.subr.mxu0 0.0
        %705 = vmatpush1.xpose.msra.mxu0 0.0
        %706 = vmatprep.subr.mxu0 0.0
        %707 = vmatpush1.xpose.msra.mxu0 0.0
        %708 = vmatprep.subr.mxu0 0.0
        %709 = vmatpush1.xpose.msra.mxu0 0.0
        %710 = vmatprep.subr.mxu0 0.0
        %711 = vmatpush1.xpose.msra.mxu0 0.0
        %712 = vmatprep.subr.mxu0 0.0
        %713 = vmatpush1.xpose.msra.mxu0 0.0
        %714 = vmatprep.subr.mxu0 0.0
        %715 = vmatpush1.xpose.msra.mxu0 0.0
        %716 = vmatprep.subr.mxu0 0.0
        %717 = vmatpush1.xpose.msra.mxu0 0.0
        %718 = vmatprep.subr.mxu0 0.0
        %719 = vmatpush1.xpose.msra.mxu0 0.0
        %720 = vmatprep.subr.mxu0 0.0
        %721 = vmatpush1.xpose.msra.mxu0 0.0
        %722 = vmatprep.subr.mxu0 0.0
        %723 = vmatpush1.xpose.msra.mxu0 0.0
        %724 = vmatprep.subr.mxu0 0.0
        %725 = vmatpush1.xpose.msra.mxu0 0.0
        %726 = vmatprep.subr.mxu0 0.0
        %727 = vmatpush1.xpose.msra.mxu0 0.0
        %728 = vmatprep.subr.mxu0 0.0
        %729 = vmatpush1.xpose.msra.mxu0 0.0
        %730 = vmatprep.subr.mxu0 0.0
        %731 = vmatpush1.xpose.msra.mxu0 0.0
        %732 = vmatprep.subr.mxu0 0.0
        %733 = vmatpush1.xpose.msra.mxu0 0.0
        %734 = vmatprep.mubr.f32.mxu0 0.0
        %735 = vmatmul.mubr.f32.gmra.mrb[0].mxu0 %v665
        %v736 = vpop.f32.mrb[0].mxu0
        %v737 = vadd.f32 0.0, %v736
        %v738 = vpop.f32.mrb[0].mxu0
        %739 = vdwg.mxu0
        %v741 = vsel %vm511, %v497, 0
        %v744 = vsel %vm511, %v501, 0
        %746 = vmatprep.subr.mxu0 0.0
        %747 = vmatpush1.xpose.msra.mxu0 %v744
        %748 = vmatprep.subr.mxu0 0.0
        %749 = vmatpush1.xpose.msra.mxu0 0.0
        %750 = vmatprep.subr.mxu0 0.0
        %751 = vmatpush1.xpose.msra.mxu0 0.0
        %752 = vmatprep.subr.mxu0 0.0
        %753 = vmatpush1.xpose.msra.mxu0 0.0
        %754 = vmatprep.subr.mxu0 0.0
        %755 = vmatpush1.xpose.msra.mxu0 0.0
        %756 = vmatprep.subr.mxu0 0.0
        %757 = vmatpush1.xpose.msra.mxu0 0.0
        %758 = vmatprep.subr.mxu0 0.0
        %759 = vmatpush1.xpose.msra.mxu0 0.0
        %760 = vmatprep.subr.mxu0 0.0
        %761 = vmatpush1.xpose.msra.mxu0 0.0
        %762 = vmatprep.subr.mxu0 0.0
        %763 = vmatpush1.xpose.msra.mxu0 0.0
        %764 = vmatprep.subr.mxu0 0.0
        %765 = vmatpush1.xpose.msra.mxu0 0.0
        %766 = vmatprep.subr.mxu0 0.0
        %767 = vmatpush1.xpose.msra.mxu0 0.0
        %768 = vmatprep.subr.mxu0 0.0
        %769 = vmatpush1.xpose.msra.mxu0 0.0
        %770 = vmatprep.subr.mxu0 0.0
        %771 = vmatpush1.xpose.msra.mxu0 0.0
        %772 = vmatprep.subr.mxu0 0.0
        %773 = vmatpush1.xpose.msra.mxu0 0.0
        %774 = vmatprep.subr.mxu0 0.0
        %775 = vmatpush1.xpose.msra.mxu0 0.0
        %776 = vmatprep.subr.mxu0 0.0
        %777 = vmatpush1.xpose.msra.mxu0 0.0
        %778 = vmatprep.subr.mxu0 0.0
        %779 = vmatpush1.xpose.msra.mxu0 0.0
        %780 = vmatprep.subr.mxu0 0.0
        %781 = vmatpush1.xpose.msra.mxu0 0.0
        %782 = vmatprep.subr.mxu0 0.0
        %783 = vmatpush1.xpose.msra.mxu0 0.0
        %784 = vmatprep.subr.mxu0 0.0
        %785 = vmatpush1.xpose.msra.mxu0 0.0
        %786 = vmatprep.subr.mxu0 0.0
        %787 = vmatpush1.xpose.msra.mxu0 0.0
        %788 = vmatprep.subr.mxu0 0.0
        %789 = vmatpush1.xpose.msra.mxu0 0.0
        %790 = vmatprep.subr.mxu0 0.0
        %791 = vmatpush1.xpose.msra.mxu0 0.0
        %792 = vmatprep.subr.mxu0 0.0
        %793 = vmatpush1.xpose.msra.mxu0 0.0
        %794 = vmatprep.subr.mxu0 0.0
        %795 = vmatpush1.xpose.msra.mxu0 0.0
        %796 = vmatprep.subr.mxu0 0.0
        %797 = vmatpush1.xpose.msra.mxu0 0.0
        %798 = vmatprep.subr.mxu0 0.0
        %799 = vmatpush1.xpose.msra.mxu0 0.0
        %800 = vmatprep.subr.mxu0 0.0
        %801 = vmatpush1.xpose.msra.mxu0 0.0
        %802 = vmatprep.subr.mxu0 0.0
        %803 = vmatpush1.xpose.msra.mxu0 0.0
        %804 = vmatprep.subr.mxu0 0.0
        %805 = vmatpush1.xpose.msra.mxu0 0.0
        %806 = vmatprep.subr.mxu0 0.0
        %807 = vmatpush1.xpose.msra.mxu0 0.0
        %808 = vmatprep.subr.mxu0 0.0
        %809 = vmatpush1.xpose.msra.mxu0 0.0
        %810 = vmatprep.mubr.f32.mxu0 0.0
        %811 = vmatmul.mubr.f32.gmra.mrb[0].mxu0 %v741
        %v812 = vpop.f32.mrb[0].mxu0
        %v813 = vadd.f32 0.0, %v812
        %v814 = vpop.f32.mrb[0].mxu0
        %815 = vdwg.mxu0
        %vm816 = vcmask 64512
        %v817 = vsel %vm816, %v585, -inf
        %818 = vmax.xlane.f32.xlu0 %v817
        %v819 = vpop.xlane.xlu0 %818
        %v820 = vsel %vm816, %v661, -inf
        %821 = vmax.xlane.f32.xlu0 %v820
        %v822 = vpop.xlane.xlu0 %821
        %v823 = vsel %vm816, %v737, -inf
        %824 = vmax.xlane.f32.xlu0 %v823
        %v825 = vpop.xlane.xlu0 %824
        %v826 = vsel %vm816, %v813, -inf
        %827 = vmax.xlane.f32.xlu0 %v826
        %v828 = vpop.xlane.xlu0 %827
        %v829 = vsub.f32 %v585, %v819
        %v830 = vsub.f32 %v661, %v822
        %v831 = vsub.f32 %v737, %v825
        %v832 = vsub.f32 %v813, %v828
        %v833 = vmul.f32 %v829, 1.442695
        %v834 = vpow.pop %v833
        %v835 = vmul.f32 %v830, 1.442695
        %v836 = vpow.pop %v835
        %v837 = vmul.f32 %v831, 1.442695
        %v838 = vpow.pop %v837
        %v839 = vmul.f32 %v832, 1.442695
        %v840 = vpow.pop %v839
        %v841 = vsel %vm816, %v834, 0.0
        %842 = vadd.xlane.f32.xlu0 %v841
        %v843 = vpop.xlane.xlu0 %842
        %v844 = vsel %vm816, %v836, 0.0
        %845 = vadd.xlane.f32.xlu0 %v844
        %v846 = vpop.xlane.xlu0 %845
        %v847 = vsel %vm816, %v838, 0.0
        %848 = vadd.xlane.f32.xlu0 %v847
        %v849 = vpop.xlane.xlu0 %848
        %v850 = vsel %vm816, %v840, 0.0
        %851 = vadd.xlane.f32.xlu0 %v850
        %v852 = vpop.xlane.xlu0 %851
        %v853 = vrcp.pop %v843
        %v854 = vrcp.pop %v846
        %v855 = vrcp.pop %v849
        %v856 = vrcp.pop %v852
        %v857 = vmul.f32 %v843, %v853
        %v858 = vmul.f32 %v846, %v854
        %v859 = vmul.f32 %v849, %v855
        %v860 = vmul.f32 %v852, %v856
        %v861 = vsub.f32 2.0, %v857
        %v862 = vsub.f32 2.0, %v858
        %v863 = vsub.f32 2.0, %v859
        %v864 = vsub.f32 2.0, %v860
        %v865 = vmul.f32 %v853, %v861
        %v866 = vmul.f32 %v854, %v862
        %v867 = vmul.f32 %v855, %v863
        %v868 = vmul.f32 %v856, %v864
        %v869 = vmul.f32 %v834, %v865
        %v870 = vmul.f32 %v836, %v866
        %v871 = vmul.f32 %v838, %v867
        %v872 = vmul.f32 %v840, %v868
        %v873 = vsub.f32 1.0, %v506
        %v874 = vmul.f32 %v873, %v507
        %v875 = vmul.f32 %v873, %v508
        %v876 = vmul.f32 %v873, %v509
        %v877 = vmul.f32 %v873, %v510
        %v878 = vmul.f32 %v869, %v874
        %v879 = vmul.f32 %v870, %v875
        %v880 = vmul.f32 %v871, %v876
        %v881 = vmul.f32 %v872, %v877
        %882 = vst.msk [vmem:[%s483] sm:$0xff] %vm816, %v878
        %883 = vst.msk [vmem:[%s483 + $0x8] sm:$0xff] %vm816, %v879
        %884 = vst.msk [vmem:[%s483 + $0x10] sm:$0xff] %vm816, %v880
        %885 = vst.msk [vmem:[%s483 + $0x18] sm:$0xff] %vm816, %v881
        %v887 = vsel %vm816, %v878, 0
        %889 = vmatprep.subr.mxu0 0.0
        %890 = vmatpush1.msra.mxu0 %v502
        %891 = vmatprep.subr.mxu0 0.0
        %892 = vmatpush1.msra.mxu0 0.0
        %893 = vmatprep.subr.mxu0 0.0
        %894 = vmatpush1.msra.mxu0 0.0
        %895 = vmatprep.subr.mxu0 0.0
        %896 = vmatpush1.msra.mxu0 0.0
        %897 = vmatprep.subr.mxu0 0.0
        %898 = vmatpush1.msra.mxu0 0.0
        %899 = vmatprep.subr.mxu0 0.0
        %900 = vmatpush1.msra.mxu0 0.0
        %901 = vmatprep.subr.mxu0 0.0
        %902 = vmatpush1.msra.mxu0 0.0
        %903 = vmatprep.subr.mxu0 0.0
        %904 = vmatpush1.msra.mxu0 0.0
        %905 = vmatprep.subr.mxu0 0.0
        %906 = vmatpush1.msra.mxu0 0.0
        %907 = vmatprep.subr.mxu0 0.0
        %908 = vmatpush1.msra.mxu0 0.0
        %909 = vmatprep.subr.mxu0 0.0
        %910 = vmatpush1.msra.mxu0 0.0
        %911 = vmatprep.subr.mxu0 0.0
        %912 = vmatpush1.msra.mxu0 0.0
        %913 = vmatprep.subr.mxu0 0.0
        %914 = vmatpush1.msra.mxu0 0.0
        %915 = vmatprep.subr.mxu0 0.0
        %916 = vmatpush1.msra.mxu0 0.0
        %917 = vmatprep.subr.mxu0 0.0
        %918 = vmatpush1.msra.mxu0 0.0
        %919 = vmatprep.subr.mxu0 0.0
        %920 = vmatpush1.msra.mxu0 0.0
        %921 = vmatprep.subr.mxu0 0.0
        %922 = vmatpush1.msra.mxu0 0.0
        %923 = vmatprep.subr.mxu0 0.0
        %924 = vmatpush1.msra.mxu0 0.0
        %925 = vmatprep.subr.mxu0 0.0
        %926 = vmatpush1.msra.mxu0 0.0
        %927 = vmatprep.subr.mxu0 0.0
        %928 = vmatpush1.msra.mxu0 0.0
        %929 = vmatprep.subr.mxu0 0.0
        %930 = vmatpush1.msra.mxu0 0.0
        %931 = vmatprep.subr.mxu0 0.0
        %932 = vmatpush1.msra.mxu0 0.0
        %933 = vmatprep.subr.mxu0 0.0
        %934 = vmatpush1.msra.mxu0 0.0
        %935 = vmatprep.subr.mxu0 0.0
        %936 = vmatpush1.msra.mxu0 0.0
        %937 = vmatprep.subr.mxu0 0.0
        %938 = vmatpush1.msra.mxu0 0.0
        %939 = vmatprep.subr.mxu0 0.0
        %940 = vmatpush1.msra.mxu0 0.0
        %941 = vmatprep.subr.mxu0 0.0
        %942 = vmatpush1.msra.mxu0 0.0
        %943 = vmatprep.subr.mxu0 0.0
        %944 = vmatpush1.msra.mxu0 0.0
        %945 = vmatprep.subr.mxu0 0.0
        %946 = vmatpush1.msra.mxu0 0.0
        %947 = vmatprep.subr.mxu0 0.0
        %948 = vmatpush1.msra.mxu0 0.0
        %949 = vmatprep.subr.mxu0 0.0
        %950 = vmatpush1.msra.mxu0 0.0
        %951 = vmatprep.subr.mxu0 0.0
        %952 = vmatpush1.msra.mxu0 0.0
        %953 = vmatprep.mubr.f32.mxu0 0.0
        %954 = vmatmul.mubr.f32.gmra.mrb[0].mxu0 %v887
        %v955 = vpop.f32.mrb[0].mxu0
        %v956 = vadd.f32 0.0, %v955
        %v957 = vpop.f32.mrb[0].mxu0
        %958 = vdwg.mxu0
        %v960 = vsel %vm816, %v879, 0
        %962 = vmatprep.subr.mxu0 0.0
        %963 = vmatpush1.msra.mxu0 %v503
        %964 = vmatprep.subr.mxu0 0.0
        %965 = vmatpush1.msra.mxu0 0.0
        %966 = vmatprep.subr.mxu0 0.0
        %967 = vmatpush1.msra.mxu0 0.0
        %968 = vmatprep.subr.mxu0 0.0
        %969 = vmatpush1.msra.mxu0 0.0
        %970 = vmatprep.subr.mxu0 0.0
        %971 = vmatpush1.msra.mxu0 0.0
        %972 = vmatprep.subr.mxu0 0.0
        %973 = vmatpush1.msra.mxu0 0.0
        %974 = vmatprep.subr.mxu0 0.0
        %975 = vmatpush1.msra.mxu0 0.0
        %976 = vmatprep.subr.mxu0 0.0
        %977 = vmatpush1.msra.mxu0 0.0
        %978 = vmatprep.subr.mxu0 0.0
        %979 = vmatpush1.msra.mxu0 0.0
        %980 = vmatprep.subr.mxu0 0.0
        %981 = vmatpush1.msra.mxu0 0.0
        %982 = vmatprep.subr.mxu0 0.0
        %983 = vmatpush1.msra.mxu0 0.0
        %984 = vmatprep.subr.mxu0 0.0
        %985 = vmatpush1.msra.mxu0 0.0
        %986 = vmatprep.subr.mxu0 0.0
        %987 = vmatpush1.msra.mxu0 0.0
        %988 = vmatprep.subr.mxu0 0.0
        %989 = vmatpush1.msra.mxu0 0.0
        %990 = vmatprep.subr.mxu0 0.0
        %991 = vmatpush1.msra.mxu0 0.0
        %992 = vmatprep.subr.mxu0 0.0
        %993 = vmatpush1.msra.mxu0 0.0
        %994 = vmatprep.subr.mxu0 0.0
        %995 = vmatpush1.msra.mxu0 0.0
        %996 = vmatprep.subr.mxu0 0.0
        %997 = vmatpush1.msra.mxu0 0.0
        %998 = vmatprep.subr.mxu0 0.0
        %999 = vmatpush1.msra.mxu0 0.0
        %1000 = vmatprep.subr.mxu0 0.0
        %1001 = vmatpush1.msra.mxu0 0.0
        %1002 = vmatprep.subr.mxu0 0.0
        %1003 = vmatpush1.msra.mxu0 0.0
        %1004 = vmatprep.subr.mxu0 0.0
        %1005 = vmatpush1.msra.mxu0 0.0
        %1006 = vmatprep.subr.mxu0 0.0
        %1007 = vmatpush1.msra.mxu0 0.0
        %1008 = vmatprep.subr.mxu0 0.0
        %1009 = vmatpush1.msra.mxu0 0.0
        %1010 = vmatprep.subr.mxu0 0.0
        %1011 = vmatpush1.msra.mxu0 0.0
        %1012 = vmatprep.subr.mxu0 0.0
        %1013 = vmatpush1.msra.mxu0 0.0
        %1014 = vmatprep.subr.mxu0 0.0
        %1015 = vmatpush1.msra.mxu0 0.0
        %1016 = vmatprep.subr.mxu0 0.0
        %1017 = vmatpush1.msra.mxu0 0.0
        %1018 = vmatprep.subr.mxu0 0.0
        %1019 = vmatpush1.msra.mxu0 0.0
        %1020 = vmatprep.subr.mxu0 0.0
        %1021 = vmatpush1.msra.mxu0 0.0
        %1022 = vmatprep.subr.mxu0 0.0
        %1023 = vmatpush1.msra.mxu0 0.0
        %1024 = vmatprep.subr.mxu0 0.0
        %1025 = vmatpush1.msra.mxu0 0.0
        %1026 = vmatprep.mubr.f32.mxu0 0.0
        %1027 = vmatmul.mubr.f32.gmra.mrb[0].mxu0 %v960
        %v1028 = vpop.f32.mrb[0].mxu0
        %v1029 = vadd.f32 0.0, %v1028
        %v1030 = vpop.f32.mrb[0].mxu0
        %1031 = vdwg.mxu0
        %v1033 = vsel %vm816, %v880, 0
        %1035 = vmatprep.subr.mxu0 0.0
        %1036 = vmatpush1.msra.mxu0 %v504
        %1037 = vmatprep.subr.mxu0 0.0
        %1038 = vmatpush1.msra.mxu0 0.0
        %1039 = vmatprep.subr.mxu0 0.0
        %1040 = vmatpush1.msra.mxu0 0.0
        %1041 = vmatprep.subr.mxu0 0.0
        %1042 = vmatpush1.msra.mxu0 0.0
        %1043 = vmatprep.subr.mxu0 0.0
        %1044 = vmatpush1.msra.mxu0 0.0
        %1045 = vmatprep.subr.mxu0 0.0
        %1046 = vmatpush1.msra.mxu0 0.0
        %1047 = vmatprep.subr.mxu0 0.0
        %1048 = vmatpush1.msra.mxu0 0.0
        %1049 = vmatprep.subr.mxu0 0.0
        %1050 = vmatpush1.msra.mxu0 0.0
        %1051 = vmatprep.subr.mxu0 0.0
        %1052 = vmatpush1.msra.mxu0 0.0
        %1053 = vmatprep.subr.mxu0 0.0
        %1054 = vmatpush1.msra.mxu0 0.0
        %1055 = vmatprep.subr.mxu0 0.0
        %1056 = vmatpush1.msra.mxu0 0.0
        %1057 = vmatprep.subr.mxu0 0.0
        %1058 = vmatpush1.msra.mxu0 0.0
        %1059 = vmatprep.subr.mxu0 0.0
        %1060 = vmatpush1.msra.mxu0 0.0
        %1061 = vmatprep.subr.mxu0 0.0
        %1062 = vmatpush1.msra.mxu0 0.0
        %1063 = vmatprep.subr.mxu0 0.0
        %1064 = vmatpush1.msra.mxu0 0.0
        %1065 = vmatprep.subr.mxu0 0.0
        %1066 = vmatpush1.msra.mxu0 0.0
        %1067 = vmatprep.subr.mxu0 0.0
        %1068 = vmatpush1.msra.mxu0 0.0
        %1069 = vmatprep.subr.mxu0 0.0
        %1070 = vmatpush1.msra.mxu0 0.0
        %1071 = vmatprep.subr.mxu0 0.0
        %1072 = vmatpush1.msra.mxu0 0.0
        %1073 = vmatprep.subr.mxu0 0.0
        %1074 = vmatpush1.msra.mxu0 0.0
        %1075 = vmatprep.subr.mxu0 0.0
        %1076 = vmatpush1.msra.mxu0 0.0
        %1077 = vmatprep.subr.mxu0 0.0
        %1078 = vmatpush1.msra.mxu0 0.0
        %1079 = vmatprep.subr.mxu0 0.0
        %1080 = vmatpush1.msra.mxu0 0.0
        %1081 = vmatprep.subr.mxu0 0.0
        %1082 = vmatpush1.msra.mxu0 0.0
        %1083 = vmatprep.subr.mxu0 0.0
        %1084 = vmatpush1.msra.mxu0 0.0
        %1085 = vmatprep.subr.mxu0 0.0
        %1086 = vmatpush1.msra.mxu0 0.0
        %1087 = vmatprep.subr.mxu0 0.0
        %1088 = vmatpush1.msra.mxu0 0.0
        %1089 = vmatprep.subr.mxu0 0.0
        %1090 = vmatpush1.msra.mxu0 0.0
        %1091 = vmatprep.subr.mxu0 0.0
        %1092 = vmatpush1.msra.mxu0 0.0
        %1093 = vmatprep.subr.mxu0 0.0
        %1094 = vmatpush1.msra.mxu0 0.0
        %1095 = vmatprep.subr.mxu0 0.0
        %1096 = vmatpush1.msra.mxu0 0.0
        %1097 = vmatprep.subr.mxu0 0.0
        %1098 = vmatpush1.msra.mxu0 0.0
        %1099 = vmatprep.mubr.f32.mxu0 0.0
        %1100 = vmatmul.mubr.f32.gmra.mrb[0].mxu0 %v1033
        %v1101 = vpop.f32.mrb[0].mxu0
        %v1102 = vadd.f32 0.0, %v1101
        %v1103 = vpop.f32.mrb[0].mxu0
        %1104 = vdwg.mxu0
        %v1106 = vsel %vm816, %v881, 0
        %1108 = vmatprep.subr.mxu0 0.0
        %1109 = vmatpush1.msra.mxu0 %v505
        %1110 = vmatprep.subr.mxu0 0.0
        %1111 = vmatpush1.msra.mxu0 0.0
        %1112 = vmatprep.subr.mxu0 0.0
        %1113 = vmatpush1.msra.mxu0 0.0
        %1114 = vmatprep.subr.mxu0 0.0
        %1115 = vmatpush1.msra.mxu0 0.0
        %1116 = vmatprep.subr.mxu0 0.0
        %1117 = vmatpush1.msra.mxu0 0.0
        %1118 = vmatprep.subr.mxu0 0.0
        %1119 = vmatpush1.msra.mxu0 0.0
        %1120 = vmatprep.subr.mxu0 0.0
        %1121 = vmatpush1.msra.mxu0 0.0
        %1122 = vmatprep.subr.mxu0 0.0
        %1123 = vmatpush1.msra.mxu0 0.0
        %1124 = vmatprep.subr.mxu0 0.0
        %1125 = vmatpush1.msra.mxu0 0.0
        %1126 = vmatprep.subr.mxu0 0.0
        %1127 = vmatpush1.msra.mxu0 0.0
        %1128 = vmatprep.subr.mxu0 0.0
        %1129 = vmatpush1.msra.mxu0 0.0
        %1130 = vmatprep.subr.mxu0 0.0
        %1131 = vmatpush1.msra.mxu0 0.0
        %1132 = vmatprep.subr.mxu0 0.0
        %1133 = vmatpush1.msra.mxu0 0.0
        %1134 = vmatprep.subr.mxu0 0.0
        %1135 = vmatpush1.msra.mxu0 0.0
        %1136 = vmatprep.subr.mxu0 0.0
        %1137 = vmatpush1.msra.mxu0 0.0
        %1138 = vmatprep.subr.mxu0 0.0
        %1139 = vmatpush1.msra.mxu0 0.0
        %1140 = vmatprep.subr.mxu0 0.0
        %1141 = vmatpush1.msra.mxu0 0.0
        %1142 = vmatprep.subr.mxu0 0.0
        %1143 = vmatpush1.msra.mxu0 0.0
        %1144 = vmatprep.subr.mxu0 0.0
        %1145 = vmatpush1.msra.mxu0 0.0
        %1146 = vmatprep.subr.mxu0 0.0
        %1147 = vmatpush1.msra.mxu0 0.0
        %1148 = vmatprep.subr.mxu0 0.0
        %1149 = vmatpush1.msra.mxu0 0.0
        %1150 = vmatprep.subr.mxu0 0.0
        %1151 = vmatpush1.msra.mxu0 0.0
        %1152 = vmatprep.subr.mxu0 0.0
        %1153 = vmatpush1.msra.mxu0 0.0
        %1154 = vmatprep.subr.mxu0 0.0
        %1155 = vmatpush1.msra.mxu0 0.0
        %1156 = vmatprep.subr.mxu0 0.0
        %1157 = vmatpush1.msra.mxu0 0.0
        %1158 = vmatprep.subr.mxu0 0.0
        %1159 = vmatpush1.msra.mxu0 0.0
        %1160 = vmatprep.subr.mxu0 0.0
        %1161 = vmatpush1.msra.mxu0 0.0
        %1162 = vmatprep.subr.mxu0 0.0
        %1163 = vmatpush1.msra.mxu0 0.0
        %1164 = vmatprep.subr.mxu0 0.0
        %1165 = vmatpush1.msra.mxu0 0.0
        %1166 = vmatprep.subr.mxu0 0.0
        %1167 = vmatpush1.msra.mxu0 0.0
        %1168 = vmatprep.subr.mxu0 0.0
        %1169 = vmatpush1.msra.mxu0 0.0
        %1170 = vmatprep.subr.mxu0 0.0
        %1171 = vmatpush1.msra.mxu0 0.0
        %1172 = vmatprep.mubr.f32.mxu0 0.0
        %1173 = vmatmul.mubr.f32.gmra.mrb[0].mxu0 %v1106
        %v1174 = vpop.f32.mrb[0].mxu0
        %v1175 = vadd.f32 0.0, %v1174
        %v1176 = vpop.f32.mrb[0].mxu0
        %1177 = vdwg.mxu0
        %1178 = vst.msk [vmem:[%s476] sm:$0xff] %vm511, %v956
        %1179 = vst.msk [vmem:[%s476 + $0x8] sm:$0xff] %vm511, %v1029
        %1180 = vst.msk [vmem:[%s476 + $0x10] sm:$0xff] %vm511, %v1102
        %1181 = vst.msk [vmem:[%s476 + $0x18] sm:$0xff] %vm511, %v1175
        %s1182 = sand.u32 %s208, 1
        %s1183 = scalar_lea.sflag [#allocation4], %s1182
        %s1184 = sand.u32 %s208, 1
        %s1185 = smul.addr %s1184, 32
        %s1186 = scalar_lea.vmem [#allocation11], %s1185
        %s1187 = sand.u32 %s238, 1
        %s1188 = scalar_lea.sflag [#allocation13], %s1187
        %s1189 = sand.u32 %s238, 1
        %s1190 = smul.addr %s1189, 32
        %s1191 = scalar_lea.vmem [#allocation12], %s1190
        // Predicated region
        $region61: #{tpu_custom_call.1} parent=39 // pred_check
          %p1192 = pneg %p218
        $region62: #{tpu_custom_call.1} parent=39 // pred_check_branch
          %1194 = sbr.rel (%p1192) target = $region64
        $region63: #{tpu_custom_call.1} parent=39 // pred_region
          %s1195 = smul.u32 4, %s39
          %s1197 = ssub.s32 512, 512
          %1198 = vsyncadd %s1183, %s1197
          %s1199 = sadd.s32 %s40, %s1195
          %s1200 = smul.addr %s38, 4
          %s1201 = sadd.s32 %s1199, %s1200
          %s1202 = smul.addr %s1201, 128
          %s1203 = scalar_lea.hbm %s5, %s1202
          %s1204 = sshll.u32 %s1186, 4
          %s1205 = int_to_ptr.vmem [resolvable:$true] %s1204
          %1210 = dma.vmem_to_hbm [thread:$0]  %s1205, 512, %s1203, %s1183, 128, 128, 8
        $region64: #{tpu_custom_call.1} parent=39 // pred_fallthru
          _
        // Predicated region
        $region65: #{tpu_custom_call.1} parent=39 // pred_check
          %p1211 = pneg %p248
        $region66: #{tpu_custom_call.1} parent=39 // pred_check_branch
          %1213 = sbr.rel (%p1211) target = $region68
        $region67: #{tpu_custom_call.1} parent=39 // pred_region
          %s1214 = smul.u32 4, %s39
          %s1216 = ssub.s32 512, 512
          %1217 = vsyncadd %s1188, %s1216
          %s1218 = sadd.s32 %s40, %s1214
          %s1219 = smul.addr %s38, 4
          %s1220 = sadd.s32 %s1218, %s1219
          %s1221 = smul.addr %s1220, 128
          %s1222 = scalar_lea.hbm %s6, %s1221
          %s1223 = sshll.u32 %s1191, 4
          %s1224 = int_to_ptr.vmem [resolvable:$true] %s1223
          %1229 = dma.vmem_to_hbm [thread:$0]  %s1224, 512, %s1222, %s1188, 128, 128, 8
        $region68: #{tpu_custom_call.1} parent=39 // pred_fallthru
          _
      $region40: #{tpu_custom_call.1} parent=5 // pred_fallthru
        _
      %p1230 = scmp.le.s32.totalorder 2, %s28
      // Predicated region
      $region69: #{tpu_custom_call.1} parent=5 // pred_check
        %p1231 = pneg %p1230
      $region70: #{tpu_custom_call.1} parent=5 // pred_check_branch
        %1233 = sbr.rel (%p1231) target = $region72
      $region71: #{tpu_custom_call.1} parent=5 // pred_region
        %s1234 = ssub.s32 %s28, 2
        // Predicated region
        $region73: #{tpu_custom_call.1} parent=71 // pred_check
          %p1235 = pneg %p224
        $region74: #{tpu_custom_call.1} parent=71 // pred_check_branch
          %1237 = sbr.rel (%p1235) target = $region76
        $region75: #{tpu_custom_call.1} parent=71 // pred_region
          %s1238 = sand.u32 %s209, 1
          %s1239 = scalar_lea.sflag [#allocation4], %s1238
          %s1240 = sand.u32 %s209, 1
          %s1241 = smul.addr %s1240, 32
          %s1242 = scalar_lea.vmem [#allocation11], %s1241
          %1243 = dma.done %s1239, 512
        $region76: #{tpu_custom_call.1} parent=71 // pred_fallthru
          _
        // Predicated region
        $region77: #{tpu_custom_call.1} parent=71 // pred_check
          %p1244 = pneg %p254
        $region78: #{tpu_custom_call.1} parent=71 // pred_check_branch
          %1246 = sbr.rel (%p1244) target = $region80
        $region79: #{tpu_custom_call.1} parent=71 // pred_region
          %s1247 = sand.u32 %s239, 1
          %s1248 = scalar_lea.sflag [#allocation13], %s1247
          %s1249 = sand.u32 %s239, 1
          %s1250 = smul.addr %s1249, 32
          %s1251 = scalar_lea.vmem [#allocation12], %s1250
          %1252 = dma.done %s1248, 512
        $region80: #{tpu_custom_call.1} parent=71 // pred_fallthru
          _
      $region72: #{tpu_custom_call.1} parent=5 // pred_fallthru
        _
    $region6: #{tpu_custom_call.1} parent=1 // loop_footer
      %s32 = sadd.s32 1, %s28
    $region7: #{tpu_custom_call.1} parent=1 // loop_footer_branch
      %27 = sbr.rel target = $region3
    $region8: #{tpu_custom_call.1} parent=1 // loop_exit
      _
    %1253 = vsyncpa [#allocation3], 1
    %s1254 = scalar_lea.sflag [#allocation3], 1
    %1255 = vsyncpa %s1254, 1
    %1256 = vsyncpa [#allocation6], 1
    %s1257 = scalar_lea.sflag [#allocation6], 1
    %1258 = vsyncpa %s1257, 1
    %1259 = vsyncpa [#allocation9], 1
    %s1260 = scalar_lea.sflag [#allocation9], 1
    %1261 = vsyncpa %s1260, 1
    %1262 = vsyncpa [#allocation4], 1
    %s1263 = scalar_lea.sflag [#allocation4], 1
    %1264 = vsyncpa %s1263, 1
    %1265 = vsyncpa [#allocation13], 1
    %s1266 = scalar_lea.sflag [#allocation13], 1
    %1267 = vsyncpa %s1266, 1

</llo_original>
